<compile_context>
chip_gen: v5e
topology: v5e:2x2
jax: 0.10.0
libtpu: 0.0.40
codegen_flags: <defaults>
</compile_context>

<pallas_src>
import jax
import jax.numpy as jnp
from jax.experimental import pallas as pl
from jax.experimental.pallas import tpu as pltpu


def _disc_shared_kernel(x_ref, v_ref, b_ref, o_ref):
    # out[n] = sum_i x[n, i] * v[i] + bias      (MXU matvec; multiply-reduce in MXU slot)
    acc = jnp.dot(x_ref[...], v_ref[...], preferred_element_type=jnp.float32)  # (TN, 1)
    o_ref[...] = (acc + b_ref[0, 0]).astype(o_ref.dtype)


def _disc_general_kernel(x_ref, s_ref, w_ref, b_ref, o_ref):
    # out[n] = sum_j (x @ W)[n, j] * s[n, j] + bias   (no W transpose; contraction reordered)
    y = jnp.dot(x_ref[...], w_ref[...], preferred_element_type=jnp.float32)    # (TN, D)
    out = jnp.sum(y * s_ref[...], axis=-1, keepdims=True) + b_ref[0, 0]
    o_ref[...] = out.astype(o_ref.dtype)


def discriminator_forward(x, s, weight, bias, *, tile_n=512):
    """x: (N, D); s: (1, D), (D,) or (N, D); weight: (D, D); bias: scalar -> squeeze((N, 1))."""
    x = jnp.asarray(x, jnp.float32)
    weight = jnp.asarray(weight, jnp.float32)
    N, D = x.shape

    s = jnp.asarray(s, jnp.float32)
    if s.ndim == 1:
        s = s.reshape(1, D)
    b = jnp.asarray(bias, jnp.float32).reshape(1, 1)

    # Row-tile size: full N if it fits one tile, otherwise a multiple of 8 sublanes.
    TN = int(min(tile_n, N))
    if TN != N and TN % 8 != 0:
        TN = max(8, (TN // 8) * 8)
    grid = (pl.cdiv(N, TN),)

    compiler_params = pltpu.CompilerParams(dimension_semantics=("parallel",))
    out_spec = pl.BlockSpec((TN, 1), lambda i: (i, 0))
    out_shape = jax.ShapeDtypeStruct((N, 1), jnp.float32)

    if s.shape[0] == 1:
        # Shared summary vector: hoist W @ s out of the per-row work (2*D^2 FLOPs, done once).
        v = jnp.dot(weight, s.reshape(D, 1))                     # (D, 1)
        out = pl.pallas_call(
            _disc_shared_kernel,
            out_shape=out_shape,
            grid=grid,
            in_specs=[
                pl.BlockSpec((TN, D), lambda i: (i, 0)),         # x tile stream
                pl.BlockSpec((D, 1), lambda i: (0, 0)),          # v resident in VMEM
                pl.BlockSpec(memory_space=pltpu.SMEM),           # bias scalar
            ],
            out_specs=out_spec,
            compiler_params=compiler_params,
        )(x, v, b)
    else:
        # General path: s has a distinct row per sample (expand_as is a no-op).
        out = pl.pallas_call(
            _disc_general_kernel,
            out_shape=out_shape,
            grid=grid,
            in_specs=[
                pl.BlockSpec((TN, D), lambda i: (i, 0)),         # x tile
                pl.BlockSpec((TN, D), lambda i: (i, 0)),         # s tile
                pl.BlockSpec((D, D), lambda i: (0, 0)),          # W resident in VMEM
                pl.BlockSpec(memory_space=pltpu.SMEM),           # bias scalar
            ],
            out_specs=out_spec,
            compiler_params=compiler_params,
        )(x, s, weight, b)

    return jnp.squeeze(out)              # torch.squeeze


def init_params(key, feat_dim):
    """Deterministic init mirroring nn.Bilinear(feat_dim, feat_dim, 1) with
    xavier_uniform_ weight and zero bias (PyTorch weight shape (1, D, D))."""
    fan_in = feat_dim * feat_dim
    fan_out = 1 * feat_dim
    bound = (6.0 / (fan_in + fan_out)) ** 0.5
    w = jax.random.uniform(key, (feat_dim, feat_dim), jnp.float32, -bound, bound)
    b = jnp.zeros((), jnp.float32)
    return w, b


if __name__ == "__main__":
    N, D = 256, 32            # nodes x feat_dim (small; tile_n=128 exercises a 2-step grid)

    key = jax.random.PRNGKey(0)
    kx, ks, kw = jax.random.split(key, 3)

    x = jax.random.normal(kx, (N, D), jnp.float32)      # per-node features
    s = jax.random.normal(ks, (1, D), jnp.float32)      # shared summary vector
    weight, bias = init_params(kw, D)

    # Fast (shared-s) path.
    out = discriminator_forward(x, s, weight, bias, tile_n=128)
    out = jax.block_until_ready(out)
    ref = jnp.einsum("ni,ij,nj->n", x, weight, jnp.broadcast_to(s, x.shape)) + bias
    assert out.shape == (N,)
    assert jnp.allclose(out, ref, atol=1e-4, rtol=1e-4)

    # General (per-row s) path.
    s_full = jax.random.normal(ks, (N, D), jnp.float32)
    out2 = jax.block_until_ready(discriminator_forward(x, s_full, weight, bias, tile_n=128))
    ref2 = jnp.einsum("ni,ij,nj->n", x, weight, s_full) + bias
    assert out2.shape == (N,)
    assert jnp.allclose(out2, ref2, atol=1e-4, rtol=1e-4)

    print("KERNEL_OK")
</pallas_src>

<mosaic_0001>
module attributes {stable_mosaic.version = 11 : i64} {
  func.func @_disc_shared_kernel(%arg0: i32, %arg1: memref<128x32xf32, #tpu.memory_space<vmem>>, %arg2: memref<32x1xf32, #tpu.memory_space<vmem>>, %arg3: memref<1x1xf32, #tpu.memory_space<smem>>, %arg4: memref<128x1xf32, #tpu.memory_space<vmem>>) attributes {dimension_semantics = [#tpu.dimension_semantics<parallel>], iteration_bounds = array<i64: 2>, scalar_prefetch = 0 : i64, scratch_operands = 0 : i64, tpu.core_type = #tpu.core_type<tc>, window_params = [{transform_indices = @transform_0, window_bounds = array<i64: 128, 32>}, {pipeline_mode = #tpu.pipeline_mode<synchronous>, transform_indices = @transform_1, window_bounds = array<i64: 32, 1>}, {transform_indices = @transform_2, window_bounds = array<i64: 1, 1>}, {transform_indices = @transform_3, window_bounds = array<i64: 128, 1>}]} {
    %c0 = arith.constant 0 : index
    %c0_0 = arith.constant 0 : index
    %0 = vector.load %arg1[%c0, %c0_0] : memref<128x32xf32, #tpu.memory_space<vmem>>, vector<128x32xf32>
    %c0_1 = arith.constant 0 : index
    %c0_2 = arith.constant 0 : index
    %1 = vector.load %arg2[%c0_1, %c0_2] : memref<32x1xf32, #tpu.memory_space<vmem>>, vector<32x1xf32>
    %cst = arith.constant dense<0.000000e+00> : vector<128x1xf32>
    %2 = tpu.matmul %0, %1, %cst {dimension_numbers = #tpu.dot_dimension_numbers<[1], [0], [0], [1], [0, 0, 1, 1], [], []>} : vector<128x32xf32>, vector<32x1xf32>, vector<128x1xf32> -> vector<128x1xf32>
    %c0_3 = arith.constant 0 : index
    %c0_4 = arith.constant 0 : index
    %3 = memref.load %arg3[%c0_3, %c0_4] : memref<1x1xf32, #tpu.memory_space<smem>>
    %4 = vector.broadcast %3 : f32 to vector<128x1xf32>
    %5 = arith.addf %2, %4 : vector<128x1xf32>
    %c0_5 = arith.constant 0 : index
    %c0_6 = arith.constant 0 : index
    %6 = vector.load %arg4[%c0_5, %c0_6] : memref<128x1xf32, #tpu.memory_space<vmem>>, vector<128x1xf32>
    tpu.vector_store %arg4[%c0_5, %c0_6], %5 {strides = array<i32>} : memref<128x1xf32, #tpu.memory_space<vmem>>, vector<128x1xf32>,
    return
  }
  func.func @transform_0(%arg0: i32) -> (i32, i32) {
    %c0_i32 = arith.constant 0 : i32
    %c0_i32_0 = arith.constant 0 : i32
    return %arg0, %c0_i32 : i32, i32
  }
  func.func @transform_1(%arg0: i32) -> (i32, i32) {
    %c0_i32 = arith.constant 0 : i32
    %c0_i32_0 = arith.constant 0 : i32
    %c0_i32_1 = arith.constant 0 : i32
    return %c0_i32, %c0_i32_0 : i32, i32
  }
  func.func @transform_2(%arg0: i32) -> (i32, i32) {
    %c0_i32 = arith.constant 0 : i32
    %c0_i32_0 = arith.constant 0 : i32
    %c0_i32_1 = arith.constant 0 : i32
    return %c0_i32, %c0_i32_0 : i32, i32
  }
  func.func @transform_3(%arg0: i32) -> (i32, i32) {
    %c0_i32 = arith.constant 0 : i32
    %c0_i32_0 = arith.constant 0 : i32
    return %arg0, %c0_i32 : i32, i32
  }
}

</mosaic_0001>

<llo_original>
// kernel: tpu_custom_call.1
$region0: #{tpu_custom_call.1}
  #allocation0 [shape = 'u32[]', space=smem, size = 0x4, offset = 0x4, fixed_abs, tag = 'smem constant byte address 0x4 - core index']
  #allocation1 [shape = 'u32[72,128]{1,0:T(1,128)}', space=vmem, size = 0x9000, scoped, tag = 'internal scratch']
  #allocation2 [shape = 'f32[1,1]{1,0:T(1,128)S(6)}', space=smem, size = 0x200, scoped, tag = 'scoped memory for tpu_custom_call.1']
  %s0 = inlined_call_operand.vmem [shape: f32[256,32], index: 0, kind: input, shape index: {}]
  %s1 = inlined_call_operand.vmem [shape: f32[32,1], index: 1, kind: input, shape index: {}]
  %s2 = inlined_call_operand.<no memory space> [shape: f32[1,1], index: 2, kind: input, shape index: {}]
  %s3 = inlined_call_operand.vmem [shape: f32[256,1], index: 3, kind: output, shape index: {}]
  %s4 = sld [smem:[#allocation0]]
  $region45: #{tpu_custom_call.1} parent=0
    _
  %s6 = ssub.s32 1, %s4
  %s7 = scalar_select 0, %s6, %s4
  %8 = sst [smem:[#allocation2]] %s2
  loop: start=0, step=1, limit=4
  $region2: #{tpu_custom_call.1} parent=0 // loop_pre_header
    _
  $region3: #{tpu_custom_call.1} parent=0 // loop_header
    %s10 = sphi 0, %s14
    %p11 = scmp.ge.s32.totalorder %s10, 4
    %s20 = sphi 0, %s22
    %s23 = sphi 0, %s20
    %s24 = sphi 0, %s23
    %s40 = sphi 0, %s24
    %s44 = sphi 0, %s44
    %s46 = sphi 0, %s44
    %s47 = sphi 0, %s46
    %s61 = sphi 0, %s47
    %s65 = sphi 0, %s65
    %s67 = sphi 0, %s65
    %s68 = sphi 0, %s67
    %s82 = sphi 0, %s68
    %s88 = sphi 0, %s90
    %s91 = sphi 0, %s88
    %s92 = sphi 0, %s91
    %s108 = sphi 0, %s92
  $region4: #{tpu_custom_call.1} parent=0 // loop_header_branch
    %13 = sbr.rel (%p11) target = $region8
  $region5: #{tpu_custom_call.1} parent=0 // loop_body
    %s15 = ssub.s32 %s10, 1
    %s16 = ssub.s32 %s10, 2
    %s17 = sadd.s32 %s10, 1
    %s18 = ssub.s32 %s10, %s17
    %p19 = scmp.eq.s32.totalorder %s18, 0
    %s21 = sadd.s32 %s20, 1
    %s22 = scalar_select %p19, %s20, %s21
    %p25 = pneg %p19
    %p26 = scmp.eq.s32.totalorder %s10, 1
    %p27 = por %p25, %p26
    %p28 = scmp.ne.s32.totalorder %s20, %s23
    %p29 = scmp.eq.s32.totalorder %s10, 0
    %p30 = por %p28, %p29
    %p31 = scmp.ne.s32.totalorder %s20, %s23
    %p32 = scmp.eq.s32.totalorder %s15, 1
    %p33 = por %p31, %p32
    %p34 = scmp.ne.s32.totalorder %s23, %s24
    %p35 = scmp.eq.s32.totalorder %s15, 0
    %p36 = por %p34, %p35
    %p37 = scmp.ne.s32.totalorder %s23, %s24
    %p38 = scmp.eq.s32.totalorder %s16, 1
    %p39 = por %p37, %p38
    %p41 = scmp.ne.s32.totalorder %s24, %s40
    %p42 = scmp.eq.s32.totalorder %s16, 0
    %p43 = por %p41, %p42
    %s45 = sadd.s32 %s44, 1
    %p48 = scmp.eq.s32.totalorder %s10, 1
    %p49 = scmp.ne.s32.totalorder %s44, %s46
    %p50 = scmp.eq.s32.totalorder %s10, 0
    %p51 = por %p49, %p50
    %p52 = scmp.ne.s32.totalorder %s44, %s46
    %p53 = scmp.eq.s32.totalorder %s15, 1
    %p54 = por %p52, %p53
    %p55 = scmp.ne.s32.totalorder %s46, %s47
    %p56 = scmp.eq.s32.totalorder %s15, 0
    %p57 = por %p55, %p56
    %p58 = scmp.ne.s32.totalorder %s46, %s47
    %p59 = scmp.eq.s32.totalorder %s16, 1
    %p60 = por %p58, %p59
    %p62 = scmp.ne.s32.totalorder %s47, %s61
    %p63 = scmp.eq.s32.totalorder %s16, 0
    %p64 = por %p62, %p63
    %s66 = sadd.s32 %s65, 1
    %p69 = scmp.eq.s32.totalorder %s10, 1
    %p70 = scmp.ne.s32.totalorder %s65, %s67
    %p71 = scmp.eq.s32.totalorder %s10, 0
    %p72 = por %p70, %p71
    %p73 = scmp.ne.s32.totalorder %s65, %s67
    %p74 = scmp.eq.s32.totalorder %s15, 1
    %p75 = por %p73, %p74
    %p76 = scmp.ne.s32.totalorder %s67, %s68
    %p77 = scmp.eq.s32.totalorder %s15, 0
    %p78 = por %p76, %p77
    %p79 = scmp.ne.s32.totalorder %s67, %s68
    %p80 = scmp.eq.s32.totalorder %s16, 1
    %p81 = por %p79, %p80
    %p83 = scmp.ne.s32.totalorder %s68, %s82
    %p84 = scmp.eq.s32.totalorder %s16, 0
    %p85 = por %p83, %p84
    %s86 = ssub.s32 %s10, %s17
    %p87 = scmp.eq.s32.totalorder %s86, 0
    %s89 = sadd.s32 %s88, 1
    %s90 = scalar_select %p87, %s88, %s89
    %p93 = pneg %p87
    %p94 = scmp.eq.s32.totalorder %s10, 1
    %p95 = por %p93, %p94
    %p96 = scmp.ne.s32.totalorder %s88, %s91
    %p97 = scmp.eq.s32.totalorder %s10, 0
    %p98 = por %p96, %p97
    %p99 = scmp.ne.s32.totalorder %s88, %s91
    %p100 = scmp.eq.s32.totalorder %s15, 1
    %p101 = por %p99, %p100
    %p102 = scmp.ne.s32.totalorder %s91, %s92
    %p103 = scmp.eq.s32.totalorder %s15, 0
    %p104 = por %p102, %p103
    %p105 = scmp.ne.s32.totalorder %s91, %s92
    %p106 = scmp.eq.s32.totalorder %s16, 1
    %p107 = por %p105, %p106
    %p109 = scmp.ne.s32.totalorder %s92, %s108
    %p110 = scmp.eq.s32.totalorder %s16, 0
    %p111 = por %p109, %p110
    %p112 = scmp.le.s32.totalorder 1, %s10
    %p113 = scmp.lt.s32.totalorder %s10, 3
    %p114 = pnand %p112, %p113
    %p115 = pneg %p114
    // Predicated region
    $region9: #{tpu_custom_call.1} parent=5 // pred_check
      _
    $region10: #{tpu_custom_call.1} parent=5 // pred_check_branch
      %117 = sbr.rel (%p114) target = $region12
    $region11: #{tpu_custom_call.1} parent=5 // pred_region
      %s118 = ssub.s32 %s10, 1
      // Predicated region
      $region13: #{tpu_custom_call.1} parent=11 // pred_check
        %p119 = pneg %p57
      $region14: #{tpu_custom_call.1} parent=11 // pred_check_branch
        %121 = sbr.rel (%p119) target = $region16
      $region15: #{tpu_custom_call.1} parent=11 // pred_region
        _
      $region16: #{tpu_custom_call.1} parent=11 // pred_fallthru
        _
      // Predicated region
      $region17: #{tpu_custom_call.1} parent=11 // pred_check
        %p122 = pneg %p78
      $region18: #{tpu_custom_call.1} parent=11 // pred_check_branch
        %124 = sbr.rel (%p122) target = $region20
      $region19: #{tpu_custom_call.1} parent=11 // pred_region
        _
      $region20: #{tpu_custom_call.1} parent=11 // pred_fallthru
        _
    $region12: #{tpu_custom_call.1} parent=5 // pred_fallthru
      _
    %p125 = scmp.lt.s32.totalorder %s10, 2
    // Predicated region
    $region21: #{tpu_custom_call.1} parent=5 // pred_check
      %p126 = pneg %p125
    $region22: #{tpu_custom_call.1} parent=5 // pred_check_branch
      %128 = sbr.rel (%p126) target = $region24
    $region23: #{tpu_custom_call.1} parent=5 // pred_region
      // Predicated region
      $region25: #{tpu_custom_call.1} parent=23 // pred_check
        %p129 = pneg %p30
      $region26: #{tpu_custom_call.1} parent=23 // pred_check_branch
        %131 = sbr.rel (%p129) target = $region28
      $region27: #{tpu_custom_call.1} parent=23 // pred_region
        %s132 = smul.u32 16, %s10
        %p133 = scmp.lt.s32.totalorder %s132, 31
        %s134 = scalar_select %p133, %s132, 31
        %s135 = smul.addr %s134, 8
        %s136 = scalar_lea.vmem %s0, %s135
        %s137 = smul.u32 16, %s10
      $region28: #{tpu_custom_call.1} parent=23 // pred_fallthru
        _
    $region24: #{tpu_custom_call.1} parent=5 // pred_fallthru
      _
    %p138 = scmp.le.s32.totalorder 1, %s10
    %p139 = scmp.lt.s32.totalorder %s10, 3
    %p140 = pnand %p138, %p139
    %p141 = pneg %p140
    // Predicated region
    $region29: #{tpu_custom_call.1} parent=5 // pred_check
      _
    $region30: #{tpu_custom_call.1} parent=5 // pred_check_branch
      %143 = sbr.rel (%p140) target = $region32
    $region31: #{tpu_custom_call.1} parent=5 // pred_region
      %s144 = ssub.s32 %s10, 1
      %s145 = smul.u32 16, %s15
      %p146 = scmp.lt.s32.totalorder %s145, 31
      %s147 = scalar_select %p146, %s145, 31
      %s148 = smul.addr %s147, 8
      %s149 = scalar_lea.vmem %s0, %s148
      %p150 = pneg %p36
      %p151 = pneg %p33
      %p152 = pneg %p57
      %p153 = pneg %p54
      %p154 = pneg %p78
      %p155 = pneg %p75
      %p156 = pneg %p104
      %p157 = pneg %p101
      %s158 = smul.u32 16, %s15
      %p159 = scmp.lt.s32.totalorder %s158, 31
      %s160 = scalar_select %p159, %s158, 31
      %s161 = smul.addr %s160, 8
      %s162 = scalar_lea.vmem %s3, %s161
      %s163 = smul.u32 16, %s15
      %p164 = scmp.lt.s32.totalorder %s163, 31
      %s165 = scalar_select %p164, %s163, 31
      %s166 = smul.addr %s165, 8
      %s167 = scalar_lea.vmem %s0, %s166
      %s168 = smul.u32 16, %s15
      %s169 = smul.u32 16, %s15
      %p170 = scmp.lt.s32.totalorder %s169, 31
      %s171 = scalar_select %p170, %s169, 31
      %s172 = smul.addr %s171, 8
      %s173 = scalar_lea.vmem %s3, %s172
      %s174 = smul.u32 16, %s15
      %v175 = vld [vmem:[%s167] sm:$0xff]
      %v176 = vld [vmem:[%s167 + $0x8] sm:$0xff]
      %v177 = vld [vmem:[%s167 + $0x10] sm:$0xff]
      %v178 = vld [vmem:[%s167 + $0x18] sm:$0xff]
      %v179 = vld [vmem:[%s167 + $0x20] sm:$0xff]
      %v180 = vld [vmem:[%s167 + $0x28] sm:$0xff]
      %v181 = vld [vmem:[%s167 + $0x30] sm:$0xff]
      %v182 = vld [vmem:[%s167 + $0x38] sm:$0xff]
      %v183 = vld [vmem:[%s167 + $0x40] sm:$0xff]
      %v184 = vld [vmem:[%s167 + $0x48] sm:$0xff]
      %v185 = vld [vmem:[%s167 + $0x50] sm:$0xff]
      %v186 = vld [vmem:[%s167 + $0x58] sm:$0xff]
      %v187 = vld [vmem:[%s167 + $0x60] sm:$0xff]
      %v188 = vld [vmem:[%s167 + $0x68] sm:$0xff]
      %v189 = vld [vmem:[%s167 + $0x70] sm:$0xff]
      %v190 = vld [vmem:[%s167 + $0x78] sm:$0xff]
      %v191 = vld [vmem:[%s1] sm:$0xff]
      %v192 = vld [vmem:[%s1 + $0x8] sm:$0xff]
      %v193 = vld [vmem:[%s1 + $0x10] sm:$0xff]
      %v194 = vld [vmem:[%s1 + $0x18] sm:$0xff]
      %s195 = sld [smem:[#allocation2]]
      %v196 = vstv %s195
      %vm197 = vcmask 261120
      %v199 = vsel %vm197, %v175, 0
      %v202 = vsel %vm197, %v176, 0
      %v205 = vsel %vm197, %v177, 0
      %v208 = vsel %vm197, %v178, 0
      %v211 = vsel %vm197, %v179, 0
      %v214 = vsel %vm197, %v180, 0
      %v217 = vsel %vm197, %v181, 0
      %v220 = vsel %vm197, %v182, 0
      %v223 = vsel %vm197, %v183, 0
      %v226 = vsel %vm197, %v184, 0
      %v229 = vsel %vm197, %v185, 0
      %v232 = vsel %vm197, %v186, 0
      %v235 = vsel %vm197, %v187, 0
      %v238 = vsel %vm197, %v188, 0
      %v241 = vsel %vm197, %v189, 0
      %v244 = vsel %vm197, %v190, 0
      %246 = vmatpush.msra.mxu0 0.0
      %247 = vmatpush.msra.mxu0 0.0
      %248 = vmatpush.msra.mxu0 0.0
      %249 = vmatpush.msra.mxu0 0.0
      %250 = vmatpush.msra.mxu0 0.0
      %251 = vmatpush.msra.mxu0 0.0
      %252 = vmatpush.msra.mxu0 0.0
      %253 = vmatpush.msra.mxu0 0.0
      %254 = vmatpush.msra.mxu0 0.0
      %255 = vmatpush.msra.mxu0 0.0
      %256 = vmatpush.msra.mxu0 0.0
      %257 = vmatpush.msra.mxu0 0.0
      %258 = vmatpush.msra.mxu0 %v194
      %259 = vmatpush.msra.mxu0 %v193
      %260 = vmatpush.msra.mxu0 %v192
      %261 = vmatpush.msra.mxu0 %v191
      %262 = vmatmul.f32.gmra.mxu0 %v199
      %v263 = vpop.f32.mrf.mxu0
      %v264 = vadd.f32 %v196, %v263
      %265 = vmatmul.f32.gmra.mxu0 %v202
      %v266 = vpop.f32.mrf.mxu0
      %v267 = vadd.f32 %v196, %v266
      %268 = vmatmul.f32.gmra.mxu0 %v205
      %v269 = vpop.f32.mrf.mxu0
      %v270 = vadd.f32 %v196, %v269
      %271 = vmatmul.f32.gmra.mxu0 %v208
      %v272 = vpop.f32.mrf.mxu0
      %v273 = vadd.f32 %v196, %v272
      %274 = vmatmul.f32.gmra.mxu0 %v211
      %v275 = vpop.f32.mrf.mxu0
      %v276 = vadd.f32 %v196, %v275
      %277 = vmatmul.f32.gmra.mxu0 %v214
      %v278 = vpop.f32.mrf.mxu0
      %v279 = vadd.f32 %v196, %v278
      %280 = vmatmul.f32.gmra.mxu0 %v217
      %v281 = vpop.f32.mrf.mxu0
      %v282 = vadd.f32 %v196, %v281
      %283 = vmatmul.f32.gmra.mxu0 %v220
      %v284 = vpop.f32.mrf.mxu0
      %v285 = vadd.f32 %v196, %v284
      %286 = vmatmul.f32.gmra.mxu0 %v223
      %v287 = vpop.f32.mrf.mxu0
      %v288 = vadd.f32 %v196, %v287
      %289 = vmatmul.f32.gmra.mxu0 %v226
      %v290 = vpop.f32.mrf.mxu0
      %v291 = vadd.f32 %v196, %v290
      %292 = vmatmul.f32.gmra.mxu0 %v229
      %v293 = vpop.f32.mrf.mxu0
      %v294 = vadd.f32 %v196, %v293
      %295 = vmatmul.f32.gmra.mxu0 %v232
      %v296 = vpop.f32.mrf.mxu0
      %v297 = vadd.f32 %v196, %v296
      %298 = vmatmul.f32.gmra.mxu0 %v235
      %v299 = vpop.f32.mrf.mxu0
      %v300 = vadd.f32 %v196, %v299
      %301 = vmatmul.f32.gmra.mxu0 %v238
      %v302 = vpop.f32.mrf.mxu0
      %v303 = vadd.f32 %v196, %v302
      %304 = vmatmul.f32.gmra.mxu0 %v241
      %v305 = vpop.f32.mrf.mxu0
      %v306 = vadd.f32 %v196, %v305
      %307 = vmatmul.f32.gmra.mxu0 %v244
      %v308 = vpop.f32.mrf.mxu0
      %v309 = vadd.f32 %v196, %v308
      %310 = vdwg.mxu0
      %vm311 = vcmask 7168
      %312 = vst.msk [vmem:[%s173] sm:$0xff] %vm311, %v264
      %313 = vst.msk [vmem:[%s173 + $0x8] sm:$0xff] %vm311, %v267
      %314 = vst.msk [vmem:[%s173 + $0x10] sm:$0xff] %vm311, %v270
      %315 = vst.msk [vmem:[%s173 + $0x18] sm:$0xff] %vm311, %v273
      %316 = vst.msk [vmem:[%s173 + $0x20] sm:$0xff] %vm311, %v276
      %317 = vst.msk [vmem:[%s173 + $0x28] sm:$0xff] %vm311, %v279
      %318 = vst.msk [vmem:[%s173 + $0x30] sm:$0xff] %vm311, %v282
      %319 = vst.msk [vmem:[%s173 + $0x38] sm:$0xff] %vm311, %v285
      %320 = vst.msk [vmem:[%s173 + $0x40] sm:$0xff] %vm311, %v288
      %321 = vst.msk [vmem:[%s173 + $0x48] sm:$0xff] %vm311, %v291
      %322 = vst.msk [vmem:[%s173 + $0x50] sm:$0xff] %vm311, %v294
      %323 = vst.msk [vmem:[%s173 + $0x58] sm:$0xff] %vm311, %v297
      %324 = vst.msk [vmem:[%s173 + $0x60] sm:$0xff] %vm311, %v300
      %325 = vst.msk [vmem:[%s173 + $0x68] sm:$0xff] %vm311, %v303
      %326 = vst.msk [vmem:[%s173 + $0x70] sm:$0xff] %vm311, %v306
      %327 = vst.msk [vmem:[%s173 + $0x78] sm:$0xff] %vm311, %v309
      %s328 = smul.u32 16, %s15
      %p329 = scmp.lt.s32.totalorder %s328, 31
      %s330 = scalar_select %p329, %s328, 31
      %s331 = smul.addr %s330, 8
      %s332 = scalar_lea.vmem %s3, %s331
      // Predicated region
      $region33: #{tpu_custom_call.1} parent=31 // pred_check
        %p333 = pneg %p101
      $region34: #{tpu_custom_call.1} parent=31 // pred_check_branch
        %335 = sbr.rel (%p333) target = $region36
      $region35: #{tpu_custom_call.1} parent=31 // pred_region
        %s336 = smul.u32 16, %s15
      $region36: #{tpu_custom_call.1} parent=31 // pred_fallthru
        _
    $region32: #{tpu_custom_call.1} parent=5 // pred_fallthru
      _
    %p337 = scmp.le.s32.totalorder 2, %s10
    // Predicated region
    $region37: #{tpu_custom_call.1} parent=5 // pred_check
      %p338 = pneg %p337
    $region38: #{tpu_custom_call.1} parent=5 // pred_check_branch
      %340 = sbr.rel (%p338) target = $region40
    $region39: #{tpu_custom_call.1} parent=5 // pred_region
      %s341 = ssub.s32 %s10, 2
      // Predicated region
      $region41: #{tpu_custom_call.1} parent=39 // pred_check
        %p342 = pneg %p107
      $region42: #{tpu_custom_call.1} parent=39 // pred_check_branch
        %344 = sbr.rel (%p342) target = $region44
      $region43: #{tpu_custom_call.1} parent=39 // pred_region
        %s345 = smul.u32 16, %s16
        %p346 = scmp.lt.s32.totalorder %s345, 31
        %s347 = scalar_select %p346, %s345, 31
        %s348 = smul.addr %s347, 8
        %s349 = scalar_lea.vmem %s3, %s348
      $region44: #{tpu_custom_call.1} parent=39 // pred_fallthru
        _
    $region40: #{tpu_custom_call.1} parent=5 // pred_fallthru
      _
  $region6: #{tpu_custom_call.1} parent=0 // loop_footer
    %s14 = sadd.s32 1, %s10
  $region7: #{tpu_custom_call.1} parent=0 // loop_footer_branch
    %9 = sbr.rel target = $region3
  $region8: #{tpu_custom_call.1} parent=0 // loop_exit
    _

</llo_original>
